<compile_context>
chip_gen: v7x
topology: tpu7x:2x2x1
jax: 0.10.0
libtpu: 0.0.40
codegen_flags: <defaults>
</compile_context>

<pallas_src>
import jax
import jax.numpy as jnp
from jax.experimental import pallas as pl
from jax.experimental.pallas import tpu as pltpu


_LANE = 128       # vreg lane width
_SUBLANE = 8      # vreg sublane count
_MAX_LANE_WIDTH = 1024
_MAX_BLOCK_BYTES = 2 * 1024 * 1024   # per-block VMEM footprint cap
_SMALL_THRESHOLD = 1 << 14           # elements; below this, launch overhead dominates


def _copy_kernel(w_ref, o_ref):
    # forward() == return self.kernel: load the tile, store it unchanged.
    o_ref[...] = w_ref[...]


def _pallas_identity_copy(x: jax.Array) -> jax.Array:
    """Tiled, lane-dense identity copy through VMEM."""
    orig_shape = x.shape
    dtype = x.dtype
    n = x.size
    itemsize = jnp.dtype(dtype).itemsize

    flat = x.reshape(-1)

    # Lane-dense width: multiple of 128, grown up to 1024 while there is
    # enough data to keep several sublane rows per block.
    width = _LANE
    while width < _MAX_LANE_WIDTH and n >= width * 2 * _SUBLANE:
        width *= 2

    rows = pl.cdiv(n, width)

    # Row block: multiple of 8 sublanes, capped so one block stays <= ~2 MiB.
    max_block_rows = max(
        _SUBLANE,
        (_MAX_BLOCK_BYTES // (width * itemsize)) // _SUBLANE * _SUBLANE,
    )
    rows_rounded = pl.cdiv(rows, _SUBLANE) * _SUBLANE
    row_block = min(max_block_rows, rows_rounded)

    rows_padded = pl.cdiv(rows, row_block) * row_block
    padded_n = rows_padded * width
    if padded_n != n:
        flat = jnp.pad(flat, (0, padded_n - n))
    x2d = flat.reshape(rows_padded, width)

    grid = (rows_padded // row_block,)

    out2d = pl.pallas_call(
        _copy_kernel,
        out_shape=jax.ShapeDtypeStruct((rows_padded, width), dtype),
        grid=grid,
        in_specs=[pl.BlockSpec((row_block, width), lambda i: (i, 0))],
        out_specs=pl.BlockSpec((row_block, width), lambda i: (i, 0)),
        compiler_params=pltpu.CompilerParams(
            dimension_semantics=("parallel",),
        ),
    )(x2d)

    return out2d.reshape(-1)[:n].reshape(orig_shape)


def learned_kernel_forward(kernel_param: jax.Array, *,
                           force_pallas: bool = False) -> jax.Array:
    """Pallas implementation of LearnedKernel.forward().

    kernel_param: (out_channels, in_channels, kH, kW), any float dtype.
    Returns an array with identical shape/dtype/values.

    For small parameters forward() is a pure identity, so we return the
    parameter directly (no kernel launch).  Large parameters (or
    force_pallas=True) go through the tiled Pallas copy kernel.
    """
    if not force_pallas and kernel_param.size < _SMALL_THRESHOLD:
        # Identity forward: the cheapest copy is no copy.
        return jnp.asarray(kernel_param)
    return _pallas_identity_copy(kernel_param)


def init_learned_kernel(out_channels: int, in_channels: int,
                        kernel_size: int, init: str = "zero",
                        key=None, dtype=jnp.float32) -> jax.Array:
    """Deterministic parameter construction matching LearnedKernel.__init__."""
    shape = (out_channels, in_channels, kernel_size, kernel_size)
    if init == "zero":
        return jnp.zeros(shape, dtype=dtype)
    elif init == "normal":
        if key is None:
            key = jax.random.PRNGKey(0)
        return jax.random.normal(key, shape, dtype=dtype)
    else:
        raise ValueError(f"Invalid init={init!r}")


if __name__ == "__main__":
    key = jax.random.PRNGKey(0)

    out_channels, in_channels, kernel_size = 8, 4, 3

    # 'normal' init (deterministic via PRNGKey(0)) so the copy is non-trivial.
    kernel_param = init_learned_kernel(
        out_channels, in_channels, kernel_size, init="normal", key=key
    )

    # Exercise the Pallas copy kernel explicitly (force_pallas=True) even at
    # this small shape, and verify it round-trips exactly.
    out = learned_kernel_forward(kernel_param, force_pallas=True)
    out = jax.block_until_ready(out)
    assert out.shape == (out_channels, in_channels, kernel_size, kernel_size)
    assert out.dtype == kernel_param.dtype
    assert bool(jnp.allclose(out, kernel_param))

    # Default (fast) path: identity forward, no kernel launch.
    out_fast = jax.block_until_ready(learned_kernel_forward(kernel_param))
    assert bool(jnp.allclose(out_fast, kernel_param))

    # 'zero' init path (default in the PyTorch module), via the kernel.
    kernel_zero = init_learned_kernel(
        out_channels, in_channels, kernel_size, init="zero"
    )
    out_zero = jax.block_until_ready(
        learned_kernel_forward(kernel_zero, force_pallas=True)
    )
    assert bool(jnp.all(out_zero == 0))

    print("KERNEL_OK")
</pallas_src>

<mosaic_0001>
module attributes {stable_mosaic.version = 11 : i64} {
  func.func @_copy_kernel(%arg0: i32, %arg1: memref<8x128xf32, #tpu.memory_space<vmem>>, %arg2: memref<8x128xf32, #tpu.memory_space<vmem>>) attributes {dimension_semantics = [#tpu.dimension_semantics<parallel>], iteration_bounds = array<i64: 1>, scalar_prefetch = 0 : i64, scratch_operands = 0 : i64, tpu.core_type = #tpu.core_type<tc>, window_params = [{transform_indices = @transform_0, window_bounds = array<i64: 8, 128>}, {transform_indices = @transform_1, window_bounds = array<i64: 8, 128>}]} {
    %c0 = arith.constant 0 : index
    %c0_0 = arith.constant 0 : index
    %0 = vector.load %arg1[%c0, %c0_0] : memref<8x128xf32, #tpu.memory_space<vmem>>, vector<8x128xf32>
    %c0_1 = arith.constant 0 : index
    %c0_2 = arith.constant 0 : index
    %1 = vector.load %arg2[%c0_1, %c0_2] : memref<8x128xf32, #tpu.memory_space<vmem>>, vector<8x128xf32>
    tpu.vector_store %arg2[%c0_1, %c0_2], %0 {strides = array<i32>} : memref<8x128xf32, #tpu.memory_space<vmem>>, vector<8x128xf32>,
    return
  }
  func.func @transform_0(%arg0: i32) -> (i32, i32) {
    %c0_i32 = arith.constant 0 : i32
    %c0_i32_0 = arith.constant 0 : i32
    return %arg0, %c0_i32 : i32, i32
  }
  func.func @transform_1(%arg0: i32) -> (i32, i32) {
    %c0_i32 = arith.constant 0 : i32
    %c0_i32_0 = arith.constant 0 : i32
    return %arg0, %c0_i32 : i32, i32
  }
}

</mosaic_0001>

<llo_original>
// kernel: tpu_custom_call.1
$region0: #{tpu_custom_call.1}
  #allocation0 [shape = 'u32[]', space=smem, size = 0x4, offset = 0x4, fixed_abs, tag = 'smem constant byte address 0x4 - core index']
  #allocation1 [shape = 'u32[144,128]{1,0:T(1,128)}', space=vmem, size = 0x12000, scoped, tag = 'internal scratch']
  %s0 = inlined_call_operand.hbm [shape: f32[8,128], index: 0, kind: input, shape index: {}]
  %s1 = inlined_call_operand.hbm [shape: f32[8,128], index: 1, kind: output, shape index: {}]
  %s2 = sld [smem:[#allocation0]]
  $region18: #{tpu_custom_call.1} parent=0
    _
  %s4 = ssub.s32 1, %s2
  %s5 = scalar_select 0, %s4, %s2
  $region1: #{tpu_custom_call.1} parent=0
    #allocation2 [shape = 'u8[4096]{0}', space=vmem, size = 0x1000, scoped, tag = 'input window, operand 0, single buffered']
    #allocation3 [shape = 's32[1]{0}', space=sflag, size = 0x4, scoped, tag = 'scoped memory for tpu_custom_call.1']
    #allocation4 [shape = 's32[1]{0}', space=sflag, size = 0x4, scoped, tag = 'scoped memory for tpu_custom_call.1']
    #allocation5 [shape = 'u8[4096]{0}', space=vmem, size = 0x1000, scoped, tag = 'output window, operand 0, single buffered']
    %6 = vsyncpa [#allocation3], 0
    %7 = vsyncpa [#allocation4], 0
    // Predicated region
    $region2: #{tpu_custom_call.1} parent=1 // pred_check
      _
    $region3: #{tpu_custom_call.1} parent=1 // pred_check_branch
      %9 = sbr.rel (0) target = $region5
    $region4: #{tpu_custom_call.1} parent=1 // pred_region
      %s11 = ssub.s32 128, 128
      %12 = vsyncadd [#allocation3], %s11
      %s14 = sshll.u32 [#allocation2], 4
      %s15 = int_to_ptr.vmem [resolvable:$true] %s14
      %17 = dma.hbm_to_vmem [thread:$0]  %s0, 128, %s15, [#allocation3]
    $region5: #{tpu_custom_call.1} parent=1 // pred_fallthru
      _
    // Predicated region
    $region6: #{tpu_custom_call.1} parent=1 // pred_check
      _
    $region7: #{tpu_custom_call.1} parent=1 // pred_check_branch
      %19 = sbr.rel (0) target = $region9
    $region8: #{tpu_custom_call.1} parent=1 // pred_region
      %20 = dma.done [#allocation3], 128
    $region9: #{tpu_custom_call.1} parent=1 // pred_fallthru
      _
    %v21 = vld [vmem:[#allocation2] sm:$0xff]
    %22 = vst [vmem:[#allocation5] sm:$0xff] %v21
    // Predicated region
    $region10: #{tpu_custom_call.1} parent=1 // pred_check
      _
    $region11: #{tpu_custom_call.1} parent=1 // pred_check_branch
      %24 = sbr.rel (0) target = $region13
    $region12: #{tpu_custom_call.1} parent=1 // pred_region
      %s26 = ssub.s32 128, 128
      %27 = vsyncadd [#allocation4], %s26
      %s29 = sshll.u32 [#allocation5], 4
      %s30 = int_to_ptr.vmem [resolvable:$true] %s29
      %32 = dma.vmem_to_hbm [thread:$0]  %s30, 128, %s1, [#allocation4]
    $region13: #{tpu_custom_call.1} parent=1 // pred_fallthru
      _
    // Predicated region
    $region14: #{tpu_custom_call.1} parent=1 // pred_check
      _
    $region15: #{tpu_custom_call.1} parent=1 // pred_check_branch
      %34 = sbr.rel (0) target = $region17
    $region16: #{tpu_custom_call.1} parent=1 // pred_region
      %35 = dma.done [#allocation4], 128
    $region17: #{tpu_custom_call.1} parent=1 // pred_fallthru
      _
    %36 = vsyncpa [#allocation3], 1
    %37 = vsyncpa [#allocation4], 1

</llo_original>
